<compile_context>
chip_gen: v5e
topology: v5e:2x2
jax: 0.10.0
libtpu: 0.0.40
codegen_flags: <defaults>
</compile_context>

<pallas_src>
import functools

import jax
import jax.numpy as jnp
from jax.experimental import pallas as pl
from jax.experimental.pallas import tpu as pltpu

LANE = 128
SUBLANE = 8


def _round_up(n, m):
    return (n + m - 1) // m * m


def _pad2d(a, rows, cols):
    r, c = a.shape
    if r == rows and c == cols:
        return a
    return jnp.pad(a, ((0, rows - r), (0, cols - c)))


def _mlp_kernel(has_bias, compute_dtype, *refs):
    """Fused MLP forward for one batch tile.

    refs = (x_ref, W0[, b0], W1[, b1], ..., W_last[, b_last], out_ref)
    has_bias[i] tells whether layer i has a bias ref.
    """
    x_ref = refs[0]
    out_ref = refs[-1]
    param_refs = refs[1:-1]
    n_layers = len(has_bias)

    h = x_ref[...]                               # already compute_dtype (bf16)
    idx = 0
    for layer in range(n_layers):
        w = param_refs[idx][...]
        idx += 1
        # bf16 (or requested dtype) inputs into the MXU, f32 accumulation.
        h = jnp.dot(h.astype(compute_dtype), w.astype(compute_dtype),
                    preferred_element_type=jnp.float32)
        if has_bias[layer]:
            b = param_refs[idx][...]
            idx += 1
            h = h + b.astype(jnp.float32)        # bias add in f32 on the VPU
        if layer != n_layers - 1:
            h = jnp.maximum(h, 0.0)              # ReLU on the VPU
    out_ref[...] = h.astype(out_ref.dtype)


def mydnn_forward(x, params, *, batch_tile=256, compute_dtype=jnp.bfloat16):
    """Fused myDNN forward as one pallas_call with a batch-tiled grid.

    x:      [B, layers[0]] float32
    params: list of (W, b) per layer (W: (in, out), b: (out,) or None for the last
            layer when lastbias=False).
    """
    B, in_dim = x.shape
    out_dtype = x.dtype
    out_dim = params[-1][0].shape[1]
    has_bias = tuple(b is not None for (_, b) in params)

    # Lane-pad every feature dim up to a multiple of 128.
    feat = [in_dim] + [w.shape[1] for (w, _) in params]
    feat_p = [_round_up(f, LANE) for f in feat]

    # Batch tile: MXU-friendly (<=256 rows) but never larger than the sublane-padded batch.
    tb = min(batch_tile, _round_up(B, SUBLANE))
    b_pad = _round_up(B, tb)
    grid_b = b_pad // tb

    # bf16 x: half the input DMA; matmul inputs were bf16 anyway.
    x_p = _pad2d(x, b_pad, feat_p[0]).astype(compute_dtype)

    flat_args = [x_p]
    in_specs = [pl.BlockSpec((tb, feat_p[0]), lambda i: (i, 0))]
    for li, (w, b) in enumerate(params):
        kp, np_ = feat_p[li], feat_p[li + 1]
        w_p = _pad2d(w, kp, np_).astype(compute_dtype)   # bf16 weights: half DMA + VMEM
        flat_args.append(w_p)
        # Constant index_map -> weight stays VMEM-resident across batch tiles.
        in_specs.append(pl.BlockSpec((kp, np_), lambda i: (0, 0)))
        if b is not None:
            b_p = _pad2d(b.reshape(1, -1), 1, np_)       # bias kept in f32 (tiny)
            flat_args.append(b_p)
            in_specs.append(pl.BlockSpec((1, np_), lambda i: (0, 0)))

    out_spec = pl.BlockSpec((tb, feat_p[-1]), lambda i: (i, 0))
    out_shape = jax.ShapeDtypeStruct((b_pad, feat_p[-1]), out_dtype)

    # Explicit VMEM budget: (possibly double-buffered) resident params
    # + double-buffered x/out tiles + headroom for the f32 intermediates.
    nbytes = lambda a: a.size * a.dtype.itemsize
    param_bytes = sum(nbytes(a) for a in flat_args[1:])
    io_bytes = 2 * tb * (feat_p[0] * jnp.dtype(compute_dtype).itemsize
                         + feat_p[-1] * jnp.dtype(out_dtype).itemsize)
    act_bytes = 6 * 4 * tb * max(feat_p)
    vmem_limit = int(min(max(2 * param_bytes + 2 * io_bytes + act_bytes + (4 << 20),
                             16 << 20), 64 << 20))

    flops = 2 * b_pad * sum(feat_p[i] * feat_p[i + 1] for i in range(len(params)))
    bytes_accessed = (nbytes(x_p) + param_bytes
                      + b_pad * feat_p[-1] * jnp.dtype(out_dtype).itemsize)
    cost = pl.CostEstimate(flops=flops, transcendentals=0,
                           bytes_accessed=bytes_accessed)

    kernel = functools.partial(_mlp_kernel, has_bias, compute_dtype)

    out = pl.pallas_call(
        kernel,
        out_shape=out_shape,
        grid_spec=pltpu.PrefetchScalarGridSpec(
            num_scalar_prefetch=0,
            grid=(grid_b,),
            in_specs=in_specs,
            out_specs=out_spec,
        ),
        compiler_params=pltpu.CompilerParams(
            dimension_semantics=("parallel",),   # shard batch tiles across v7x's 2 TCs
            vmem_limit_bytes=vmem_limit,
        ),
        cost_estimate=cost,
    )(*flat_args)

    # Strip batch / lane padding.
    return out[:B, :out_dim]


def init_params(key, layers, lastbias=False):
    """Deterministic parameter init mirroring myDNN.__init__ shapes.

    PyTorch Linear(in, out) stores weight (out, in); we store (in, out).
    """
    params = []
    depth = len(layers) - 1
    keys = jax.random.split(key, depth * 2)
    for i in range(depth):
        fan_in = layers[i]
        bound = 1.0 / jnp.sqrt(fan_in)
        w = jax.random.uniform(
            keys[2 * i], (layers[i], layers[i + 1]),
            minval=-bound, maxval=bound, dtype=jnp.float32)
        is_last = i == depth - 1
        if is_last and not lastbias:
            b = None
        else:
            b = jax.random.uniform(
                keys[2 * i + 1], (layers[i + 1],),
                minval=-bound, maxval=bound, dtype=jnp.float32)
        params.append((w, b))
    return params


def reference_forward(x, params, compute_dtype=None):
    """Pure-JAX reference matching the PyTorch forward semantics.

    compute_dtype=None -> exact f32; compute_dtype=bf16 mirrors the kernel's
    bf16-in / f32-accumulate matmuls.
    """
    h = x.astype(jnp.float32)
    n = len(params)
    for i, (w, b) in enumerate(params):
        if compute_dtype is not None:
            h = jnp.dot(h.astype(compute_dtype), w.astype(compute_dtype),
                        preferred_element_type=jnp.float32)
        else:
            h = h @ w
        if b is not None:
            h = h + b
        if i != n - 1:
            h = jnp.maximum(h, 0.0)
    return h


if __name__ == "__main__":
    # Small shapes consistent with a myDNN([32, 64, 64, 16]) module.
    layers = [32, 64, 64, 16]
    batch = 8
    lastbias = False  # myDNN default

    key = jax.random.PRNGKey(0)
    k_x, k_p = jax.random.split(key)
    x = jax.random.normal(k_x, (batch, layers[0]), dtype=jnp.float32)
    params = init_params(k_p, layers, lastbias=lastbias)

    out = mydnn_forward(x, params)
    out = jax.block_until_ready(out)

    ref_bf16 = reference_forward(x, params, compute_dtype=jnp.bfloat16)
    ref_f32 = reference_forward(x, params)

    assert out.shape == (batch, layers[-1])
    assert jnp.allclose(out, ref_bf16, atol=2e-3, rtol=2e-3), "mismatch vs bf16 reference"
    assert jnp.allclose(out, ref_f32, atol=5e-2, rtol=5e-2), "mismatch vs f32 reference"

    print("KERNEL_OK")
</pallas_src>

<mosaic_0001>
module attributes {stable_mosaic.version = 11 : i64} {
  func.func @_mlp_kernel(%arg0: i32, %arg1: memref<8x128xbf16, #tpu.memory_space<vmem>>, %arg2: memref<128x128xbf16, #tpu.memory_space<vmem>>, %arg3: memref<1x128xf32, #tpu.memory_space<vmem>>, %arg4: memref<128x128xbf16, #tpu.memory_space<vmem>>, %arg5: memref<1x128xf32, #tpu.memory_space<vmem>>, %arg6: memref<128x128xbf16, #tpu.memory_space<vmem>>, %arg7: memref<8x128xf32, #tpu.memory_space<vmem>>) attributes {dimension_semantics = [#tpu.dimension_semantics<parallel>], iteration_bounds = array<i64: 1>, scalar_prefetch = 0 : i64, scratch_operands = 0 : i64, tpu.core_type = #tpu.core_type<tc>, window_params = [{transform_indices = @transform_0, window_bounds = array<i64: 8, 128>}, {pipeline_mode = #tpu.pipeline_mode<synchronous>, transform_indices = @transform_1, window_bounds = array<i64: 128, 128>}, {pipeline_mode = #tpu.pipeline_mode<synchronous>, transform_indices = @transform_2, window_bounds = array<i64: 1, 128>}, {pipeline_mode = #tpu.pipeline_mode<synchronous>, transform_indices = @transform_3, window_bounds = array<i64: 128, 128>}, {pipeline_mode = #tpu.pipeline_mode<synchronous>, transform_indices = @transform_4, window_bounds = array<i64: 1, 128>}, {pipeline_mode = #tpu.pipeline_mode<synchronous>, transform_indices = @transform_5, window_bounds = array<i64: 128, 128>}, {transform_indices = @transform_6, window_bounds = array<i64: 8, 128>}]} {
    %c0 = arith.constant 0 : index
    %c0_0 = arith.constant 0 : index
    %0 = vector.load %arg1[%c0, %c0_0] : memref<8x128xbf16, #tpu.memory_space<vmem>>, vector<8x128xbf16>
    %c0_1 = arith.constant 0 : index
    %c0_2 = arith.constant 0 : index
    %1 = vector.load %arg2[%c0_1, %c0_2] : memref<128x128xbf16, #tpu.memory_space<vmem>>, vector<128x128xbf16>
    %cst = arith.constant dense<0.000000e+00> : vector<8x128xf32>
    %2 = tpu.matmul %0, %1, %cst {dimension_numbers = #tpu.dot_dimension_numbers<[1], [0], [0], [1], [0, 0, 1, 1], [], []>} : vector<8x128xbf16>, vector<128x128xbf16>, vector<8x128xf32> -> vector<8x128xf32>
    %c0_3 = arith.constant 0 : index
    %c0_4 = arith.constant 0 : index
    %3 = vector.load %arg3[%c0_3, %c0_4] : memref<1x128xf32, #tpu.memory_space<vmem>>, vector<1x128xf32>
    %4 = vector.broadcast %3 : vector<1x128xf32> to vector<8x128xf32>
    %5 = arith.addf %2, %4 : vector<8x128xf32>
    %cst_5 = arith.constant 0.000000e+00 : f32
    %6 = vector.broadcast %cst_5 : f32 to vector<8x128xf32>
    %7 = arith.maximumf %5, %6 : vector<8x128xf32>
    %c0_6 = arith.constant 0 : index
    %c0_7 = arith.constant 0 : index
    %8 = vector.load %arg4[%c0_6, %c0_7] : memref<128x128xbf16, #tpu.memory_space<vmem>>, vector<128x128xbf16>
    %9 = arith.truncf %7 : vector<8x128xf32> to vector<8x128xbf16>
    %cst_8 = arith.constant dense<0.000000e+00> : vector<8x128xf32>
    %10 = tpu.matmul %9, %8, %cst_8 {dimension_numbers = #tpu.dot_dimension_numbers<[1], [0], [0], [1], [0, 0, 1, 1], [], []>} : vector<8x128xbf16>, vector<128x128xbf16>, vector<8x128xf32> -> vector<8x128xf32>
    %c0_9 = arith.constant 0 : index
    %c0_10 = arith.constant 0 : index
    %11 = vector.load %arg5[%c0_9, %c0_10] : memref<1x128xf32, #tpu.memory_space<vmem>>, vector<1x128xf32>
    %12 = vector.broadcast %11 : vector<1x128xf32> to vector<8x128xf32>
    %13 = arith.addf %10, %12 : vector<8x128xf32>
    %cst_11 = arith.constant 0.000000e+00 : f32
    %14 = vector.broadcast %cst_11 : f32 to vector<8x128xf32>
    %15 = arith.maximumf %13, %14 : vector<8x128xf32>
    %c0_12 = arith.constant 0 : index
    %c0_13 = arith.constant 0 : index
    %16 = vector.load %arg6[%c0_12, %c0_13] : memref<128x128xbf16, #tpu.memory_space<vmem>>, vector<128x128xbf16>
    %17 = arith.truncf %15 : vector<8x128xf32> to vector<8x128xbf16>
    %cst_14 = arith.constant dense<0.000000e+00> : vector<8x128xf32>
    %18 = tpu.matmul %17, %16, %cst_14 {dimension_numbers = #tpu.dot_dimension_numbers<[1], [0], [0], [1], [0, 0, 1, 1], [], []>} : vector<8x128xbf16>, vector<128x128xbf16>, vector<8x128xf32> -> vector<8x128xf32>
    %c0_15 = arith.constant 0 : index
    %c0_16 = arith.constant 0 : index
    %19 = vector.load %arg7[%c0_15, %c0_16] : memref<8x128xf32, #tpu.memory_space<vmem>>, vector<8x128xf32>
    tpu.vector_store %arg7[%c0_15, %c0_16], %18 {strides = array<i32>} : memref<8x128xf32, #tpu.memory_space<vmem>>, vector<8x128xf32>,
    return
  }
  func.func @transform_0(%arg0: i32) -> (i32, i32) {
    %c0_i32 = arith.constant 0 : i32
    %c0_i32_0 = arith.constant 0 : i32
    return %arg0, %c0_i32 : i32, i32
  }
  func.func @transform_1(%arg0: i32) -> (i32, i32) {
    %c0_i32 = arith.constant 0 : i32
    %c0_i32_0 = arith.constant 0 : i32
    %c0_i32_1 = arith.constant 0 : i32
    return %c0_i32, %c0_i32_0 : i32, i32
  }
  func.func @transform_2(%arg0: i32) -> (i32, i32) {
    %c0_i32 = arith.constant 0 : i32
    %c0_i32_0 = arith.constant 0 : i32
    %c0_i32_1 = arith.constant 0 : i32
    return %c0_i32, %c0_i32_0 : i32, i32
  }
  func.func @transform_3(%arg0: i32) -> (i32, i32) {
    %c0_i32 = arith.constant 0 : i32
    %c0_i32_0 = arith.constant 0 : i32
    %c0_i32_1 = arith.constant 0 : i32
    return %c0_i32, %c0_i32_0 : i32, i32
  }
  func.func @transform_4(%arg0: i32) -> (i32, i32) {
    %c0_i32 = arith.constant 0 : i32
    %c0_i32_0 = arith.constant 0 : i32
    %c0_i32_1 = arith.constant 0 : i32
    return %c0_i32, %c0_i32_0 : i32, i32
  }
  func.func @transform_5(%arg0: i32) -> (i32, i32) {
    %c0_i32 = arith.constant 0 : i32
    %c0_i32_0 = arith.constant 0 : i32
    %c0_i32_1 = arith.constant 0 : i32
    return %c0_i32, %c0_i32_0 : i32, i32
  }
  func.func @transform_6(%arg0: i32) -> (i32, i32) {
    %c0_i32 = arith.constant 0 : i32
    %c0_i32_0 = arith.constant 0 : i32
    return %arg0, %c0_i32 : i32, i32
  }
}

</mosaic_0001>

<llo_original>
// kernel: tpu_custom_call.1
$region0: #{tpu_custom_call.1}
  #allocation0 [shape = 'u32[]', space=smem, size = 0x4, offset = 0x4, fixed_abs, tag = 'smem constant byte address 0x4 - core index']
  #allocation1 [shape = 'u32[72,128]{1,0:T(1,128)}', space=vmem, size = 0x9000, scoped, tag = 'internal scratch']
  %s0 = inlined_call_operand.hbm [shape: bf16[8,128], index: 0, kind: input, shape index: {}]
  %s1 = inlined_call_operand.hbm [shape: bf16[128,128], index: 1, kind: input, shape index: {}]
  %s2 = inlined_call_operand.vmem [shape: f32[1,128], index: 2, kind: input, shape index: {}]
  %s3 = inlined_call_operand.hbm [shape: bf16[128,128], index: 3, kind: input, shape index: {}]
  %s4 = inlined_call_operand.vmem [shape: f32[1,128], index: 4, kind: input, shape index: {}]
  %s5 = inlined_call_operand.hbm [shape: bf16[128,128], index: 5, kind: input, shape index: {}]
  %s6 = inlined_call_operand.hbm [shape: f32[8,128], index: 6, kind: output, shape index: {}]
  %s7 = sld [smem:[#allocation0]]
  $region50: #{tpu_custom_call.1} parent=0
    _
  %s9 = ssub.s32 1, %s7
  %s10 = scalar_select 0, %s9, %s7
  $region1: #{tpu_custom_call.1} parent=0
    #allocation2 [shape = 'u8[2048]{0}', space=vmem, size = 0x800, scoped, tag = 'input window, operand 0, single buffered']
    #allocation3 [shape = 's32[1]{0}', space=sflag, size = 0x4, scoped, tag = 'scoped memory for tpu_custom_call.1']
    #allocation4 [shape = 's32[1]{0}', space=sflag, size = 0x4, scoped, tag = 'scoped memory for tpu_custom_call.1']
    #allocation5 [shape = 'u8[32768]{0}', space=vmem, size = 0x8000, scoped, tag = 'input window, operand 1, single buffered']
    #allocation6 [shape = 's32[1]{0}', space=sflag, size = 0x4, scoped, tag = 'scoped memory for tpu_custom_call.1']
    #allocation7 [shape = 'u8[32768]{0}', space=vmem, size = 0x8000, scoped, tag = 'input window, operand 3, single buffered']
    #allocation8 [shape = 'u8[32768]{0}', space=vmem, size = 0x8000, scoped, tag = 'input window, operand 5, single buffered']
    #allocation9 [shape = 's32[1]{0}', space=sflag, size = 0x4, scoped, tag = 'scoped memory for tpu_custom_call.1']
    #allocation10 [shape = 'u8[4096]{0}', space=vmem, size = 0x1000, scoped, tag = 'output window, operand 0, single buffered']
    %11 = vsyncpa [#allocation3], 0
    %12 = vsyncpa [#allocation6], 0
    %13 = vsyncpa [#allocation9], 0
    %14 = vsyncpa [#allocation4], 0
    // Predicated region
    $region2: #{tpu_custom_call.1} parent=1 // pred_check
      _
    $region3: #{tpu_custom_call.1} parent=1 // pred_check_branch
      %16 = sbr.rel (0) target = $region5
    $region4: #{tpu_custom_call.1} parent=1 // pred_region
      %18 = vsyncadd [#allocation3], 0
      %s20 = sshll.u32 %s0, 4
      %s21 = int_to_ptr.hbm [resolvable:$true] %s20
      %s22 = sshll.u32 [#allocation2], 4
      %s23 = int_to_ptr.vmem [resolvable:$true] %s22
      %25 = dma.hbm_to_vmem [thread:$0]  %s21, 64, %s23, [#allocation3]
    $region5: #{tpu_custom_call.1} parent=1 // pred_fallthru
      _
    // Predicated region
    $region6: #{tpu_custom_call.1} parent=1 // pred_check
      _
    $region7: #{tpu_custom_call.1} parent=1 // pred_check_branch
      %27 = sbr.rel (0) target = $region9
    $region8: #{tpu_custom_call.1} parent=1 // pred_region
      %29 = vsyncadd [#allocation6], 0
      %s30 = sshll.u32 %s1, 4
      %s31 = int_to_ptr.hbm [resolvable:$true] %s30
      %s32 = sshll.u32 [#allocation5], 4
      %s33 = int_to_ptr.vmem [resolvable:$true] %s32
      %38 = dma.hbm_to_vmem [thread:$0]  %s31, 1024, %s33, [#allocation6], 64, 64, 4
    $region9: #{tpu_custom_call.1} parent=1 // pred_fallthru
      _
    // Predicated region
    $region10: #{tpu_custom_call.1} parent=1 // pred_check
      _
    $region11: #{tpu_custom_call.1} parent=1 // pred_check_branch
      %40 = sbr.rel (0) target = $region13
    $region12: #{tpu_custom_call.1} parent=1 // pred_region
      _
    $region13: #{tpu_custom_call.1} parent=1 // pred_fallthru
      _
    // Predicated region
    $region14: #{tpu_custom_call.1} parent=1 // pred_check
      _
    $region15: #{tpu_custom_call.1} parent=1 // pred_check_branch
      %42 = sbr.rel (0) target = $region17
    $region16: #{tpu_custom_call.1} parent=1 // pred_region
      %44 = vsyncadd [#allocation6], 0
      %s45 = sshll.u32 %s3, 4
      %s46 = int_to_ptr.hbm [resolvable:$true] %s45
      %s47 = sshll.u32 [#allocation7], 4
      %s48 = int_to_ptr.vmem [resolvable:$true] %s47
      %53 = dma.hbm_to_vmem [thread:$0]  %s46, 1024, %s48, [#allocation6], 64, 64, 4
    $region17: #{tpu_custom_call.1} parent=1 // pred_fallthru
      _
    // Predicated region
    $region18: #{tpu_custom_call.1} parent=1 // pred_check
      _
    $region19: #{tpu_custom_call.1} parent=1 // pred_check_branch
      %55 = sbr.rel (0) target = $region21
    $region20: #{tpu_custom_call.1} parent=1 // pred_region
      _
    $region21: #{tpu_custom_call.1} parent=1 // pred_fallthru
      _
    // Predicated region
    $region22: #{tpu_custom_call.1} parent=1 // pred_check
      _
    $region23: #{tpu_custom_call.1} parent=1 // pred_check_branch
      %57 = sbr.rel (0) target = $region25
    $region24: #{tpu_custom_call.1} parent=1 // pred_region
      %59 = vsyncadd [#allocation9], 0
      %s60 = sshll.u32 %s5, 4
      %s61 = int_to_ptr.hbm [resolvable:$true] %s60
      %s62 = sshll.u32 [#allocation8], 4
      %s63 = int_to_ptr.vmem [resolvable:$true] %s62
      %68 = dma.hbm_to_vmem [thread:$0]  %s61, 1024, %s63, [#allocation9], 64, 64, 4
    $region25: #{tpu_custom_call.1} parent=1 // pred_fallthru
      _
    // Predicated region
    $region26: #{tpu_custom_call.1} parent=1 // pred_check
      _
    $region27: #{tpu_custom_call.1} parent=1 // pred_check_branch
      %70 = sbr.rel (0) target = $region29
    $region28: #{tpu_custom_call.1} parent=1 // pred_region
      %72 = dma.done [#allocation3], 64
    $region29: #{tpu_custom_call.1} parent=1 // pred_fallthru
      _
    // Predicated region
    $region30: #{tpu_custom_call.1} parent=1 // pred_check
      _
    $region31: #{tpu_custom_call.1} parent=1 // pred_check_branch
      %74 = sbr.rel (0) target = $region33
    $region32: #{tpu_custom_call.1} parent=1 // pred_region
      %76 = dma.done [#allocation6], 1024
    $region33: #{tpu_custom_call.1} parent=1 // pred_fallthru
      _
    // Predicated region
    $region34: #{tpu_custom_call.1} parent=1 // pred_check
      _
    $region35: #{tpu_custom_call.1} parent=1 // pred_check_branch
      %78 = sbr.rel (0) target = $region37
    $region36: #{tpu_custom_call.1} parent=1 // pred_region
      %80 = dma.done [#allocation6], 1024
    $region37: #{tpu_custom_call.1} parent=1 // pred_fallthru
      _
    // Predicated region
    $region38: #{tpu_custom_call.1} parent=1 // pred_check
      _
    $region39: #{tpu_custom_call.1} parent=1 // pred_check_branch
      %82 = sbr.rel (0) target = $region41
    $region40: #{tpu_custom_call.1} parent=1 // pred_region
      %84 = dma.done [#allocation9], 1024
    $region41: #{tpu_custom_call.1} parent=1 // pred_fallthru
      _
    %v85 = vld [vmem:[#allocation2] sm:$0xf]
    %v86 = vld [vmem:[#allocation5] sm:$0xf]
    %v87 = vld [vmem:[#allocation5 + $0x4] sm:$0xf]
    %v88 = vld [vmem:[#allocation5 + $0x8] sm:$0xf]
    %v89 = vld [vmem:[#allocation5 + $0xc] sm:$0xf]
    %v90 = vld [vmem:[#allocation5 + $0x10] sm:$0xf]
    %v91 = vld [vmem:[#allocation5 + $0x14] sm:$0xf]
    %v92 = vld [vmem:[#allocation5 + $0x18] sm:$0xf]
    %v93 = vld [vmem:[#allocation5 + $0x1c] sm:$0xf]
    %v94 = vld [vmem:[#allocation5 + $0x20] sm:$0xf]
    %v95 = vld [vmem:[#allocation5 + $0x24] sm:$0xf]
    %v96 = vld [vmem:[#allocation5 + $0x28] sm:$0xf]
    %v97 = vld [vmem:[#allocation5 + $0x2c] sm:$0xf]
    %v98 = vld [vmem:[#allocation5 + $0x30] sm:$0xf]
    %v99 = vld [vmem:[#allocation5 + $0x34] sm:$0xf]
    %v100 = vld [vmem:[#allocation5 + $0x38] sm:$0xf]
    %v101 = vld [vmem:[#allocation5 + $0x3c] sm:$0xf]
    %v102 = vld [vmem:[%s2] sm:$0x1]
    %v104 = vperm.slane %v102, 0
    %v122 = vunpack.c.l.b16 %v86
    %v123 = vunpack.c.l.b16 %v87
    %v124 = vunpack.c.l.b16 %v88
    %v125 = vunpack.c.l.b16 %v89
    %v126 = vunpack.c.l.b16 %v90
    %v127 = vunpack.c.l.b16 %v91
    %v128 = vunpack.c.l.b16 %v92
    %v129 = vunpack.c.l.b16 %v93
    %v130 = vunpack.c.l.b16 %v94
    %v131 = vunpack.c.l.b16 %v95
    %v132 = vunpack.c.l.b16 %v96
    %v133 = vunpack.c.l.b16 %v97
    %v134 = vunpack.c.l.b16 %v98
    %v135 = vunpack.c.l.b16 %v99
    %v136 = vunpack.c.l.b16 %v100
    %v137 = vunpack.c.l.b16 %v101
    %v138 = vpack.c.b16 %v123, %v122
    %v139 = vpack.c.b16 %v125, %v124
    %v140 = vpack.c.b16 %v127, %v126
    %v141 = vpack.c.b16 %v129, %v128
    %v142 = vpack.c.b16 %v131, %v130
    %v143 = vpack.c.b16 %v133, %v132
    %v144 = vpack.c.b16 %v135, %v134
    %v145 = vpack.c.b16 %v137, %v136
    %154 = vmatpush.bf16.msra.mxu0 %v145
    %155 = vmatpush.bf16.msra.mxu0 %v144
    %156 = vmatpush.bf16.msra.mxu0 %v143
    %157 = vmatpush.bf16.msra.mxu0 %v142
    %158 = vmatpush.bf16.msra.mxu0 %v141
    %159 = vmatpush.bf16.msra.mxu0 %v140
    %160 = vmatpush.bf16.msra.mxu0 %v139
    %161 = vmatpush.bf16.msra.mxu0 %v138
    %162 = vmatmul.bf16.gmra.mxu0 %v85
    %v163 = vpop.f32.mrf.mxu0
    %v164 = vadd.f32 %v104, %v163
    %v165 = vpop.f32.mrf.mxu0
    %166 = vdwg.mxu0
    %v167 = vmax.f32 %v164, 0.0
    %v168 = vld [vmem:[#allocation7] sm:$0xf]
    %v169 = vld [vmem:[#allocation7 + $0x4] sm:$0xf]
    %v170 = vld [vmem:[#allocation7 + $0x8] sm:$0xf]
    %v171 = vld [vmem:[#allocation7 + $0xc] sm:$0xf]
    %v172 = vld [vmem:[#allocation7 + $0x10] sm:$0xf]
    %v173 = vld [vmem:[#allocation7 + $0x14] sm:$0xf]
    %v174 = vld [vmem:[#allocation7 + $0x18] sm:$0xf]
    %v175 = vld [vmem:[#allocation7 + $0x1c] sm:$0xf]
    %v176 = vld [vmem:[#allocation7 + $0x20] sm:$0xf]
    %v177 = vld [vmem:[#allocation7 + $0x24] sm:$0xf]
    %v178 = vld [vmem:[#allocation7 + $0x28] sm:$0xf]
    %v179 = vld [vmem:[#allocation7 + $0x2c] sm:$0xf]
    %v180 = vld [vmem:[#allocation7 + $0x30] sm:$0xf]
    %v181 = vld [vmem:[#allocation7 + $0x34] sm:$0xf]
    %v182 = vld [vmem:[#allocation7 + $0x38] sm:$0xf]
    %v183 = vld [vmem:[#allocation7 + $0x3c] sm:$0xf]
    %v184 = vpack.c.bf16 %v167, %v167
    %v185 = vld [vmem:[%s4] sm:$0x1]
    %v187 = vperm.slane %v185, 0
    %v205 = vunpack.c.l.b16 %v168
    %v206 = vunpack.c.l.b16 %v169
    %v207 = vunpack.c.l.b16 %v170
    %v208 = vunpack.c.l.b16 %v171
    %v209 = vunpack.c.l.b16 %v172
    %v210 = vunpack.c.l.b16 %v173
    %v211 = vunpack.c.l.b16 %v174
    %v212 = vunpack.c.l.b16 %v175
    %v213 = vunpack.c.l.b16 %v176
    %v214 = vunpack.c.l.b16 %v177
    %v215 = vunpack.c.l.b16 %v178
    %v216 = vunpack.c.l.b16 %v179
    %v217 = vunpack.c.l.b16 %v180
    %v218 = vunpack.c.l.b16 %v181
    %v219 = vunpack.c.l.b16 %v182
    %v220 = vunpack.c.l.b16 %v183
    %v221 = vpack.c.b16 %v206, %v205
    %v222 = vpack.c.b16 %v208, %v207
    %v223 = vpack.c.b16 %v210, %v209
    %v224 = vpack.c.b16 %v212, %v211
    %v225 = vpack.c.b16 %v214, %v213
    %v226 = vpack.c.b16 %v216, %v215
    %v227 = vpack.c.b16 %v218, %v217
    %v228 = vpack.c.b16 %v220, %v219
    %237 = vmatpush.bf16.msra.mxu0 %v228
    %238 = vmatpush.bf16.msra.mxu0 %v227
    %239 = vmatpush.bf16.msra.mxu0 %v226
    %240 = vmatpush.bf16.msra.mxu0 %v225
    %241 = vmatpush.bf16.msra.mxu0 %v224
    %242 = vmatpush.bf16.msra.mxu0 %v223
    %243 = vmatpush.bf16.msra.mxu0 %v222
    %244 = vmatpush.bf16.msra.mxu0 %v221
    %245 = vmatmul.bf16.gmra.mxu0 %v184
    %v246 = vpop.f32.mrf.mxu0
    %v247 = vadd.f32 %v187, %v246
    %v248 = vpop.f32.mrf.mxu0
    %249 = vdwg.mxu0
    %v250 = vmax.f32 %v247, 0.0
    %v251 = vld [vmem:[#allocation8] sm:$0xf]
    %v252 = vld [vmem:[#allocation8 + $0x4] sm:$0xf]
    %v253 = vld [vmem:[#allocation8 + $0x8] sm:$0xf]
    %v254 = vld [vmem:[#allocation8 + $0xc] sm:$0xf]
    %v255 = vld [vmem:[#allocation8 + $0x10] sm:$0xf]
    %v256 = vld [vmem:[#allocation8 + $0x14] sm:$0xf]
    %v257 = vld [vmem:[#allocation8 + $0x18] sm:$0xf]
    %v258 = vld [vmem:[#allocation8 + $0x1c] sm:$0xf]
    %v259 = vld [vmem:[#allocation8 + $0x20] sm:$0xf]
    %v260 = vld [vmem:[#allocation8 + $0x24] sm:$0xf]
    %v261 = vld [vmem:[#allocation8 + $0x28] sm:$0xf]
    %v262 = vld [vmem:[#allocation8 + $0x2c] sm:$0xf]
    %v263 = vld [vmem:[#allocation8 + $0x30] sm:$0xf]
    %v264 = vld [vmem:[#allocation8 + $0x34] sm:$0xf]
    %v265 = vld [vmem:[#allocation8 + $0x38] sm:$0xf]
    %v266 = vld [vmem:[#allocation8 + $0x3c] sm:$0xf]
    %v267 = vpack.c.bf16 %v250, %v250
    %v284 = vunpack.c.l.b16 %v251
    %v285 = vunpack.c.l.b16 %v252
    %v286 = vunpack.c.l.b16 %v253
    %v287 = vunpack.c.l.b16 %v254
    %v288 = vunpack.c.l.b16 %v255
    %v289 = vunpack.c.l.b16 %v256
    %v290 = vunpack.c.l.b16 %v257
    %v291 = vunpack.c.l.b16 %v258
    %v292 = vunpack.c.l.b16 %v259
    %v293 = vunpack.c.l.b16 %v260
    %v294 = vunpack.c.l.b16 %v261
    %v295 = vunpack.c.l.b16 %v262
    %v296 = vunpack.c.l.b16 %v263
    %v297 = vunpack.c.l.b16 %v264
    %v298 = vunpack.c.l.b16 %v265
    %v299 = vunpack.c.l.b16 %v266
    %v300 = vpack.c.b16 %v285, %v284
    %v301 = vpack.c.b16 %v287, %v286
    %v302 = vpack.c.b16 %v289, %v288
    %v303 = vpack.c.b16 %v291, %v290
    %v304 = vpack.c.b16 %v293, %v292
    %v305 = vpack.c.b16 %v295, %v294
    %v306 = vpack.c.b16 %v297, %v296
    %v307 = vpack.c.b16 %v299, %v298
    %316 = vmatpush.bf16.msra.mxu0 %v307
    %317 = vmatpush.bf16.msra.mxu0 %v306
    %318 = vmatpush.bf16.msra.mxu0 %v305
    %319 = vmatpush.bf16.msra.mxu0 %v304
    %320 = vmatpush.bf16.msra.mxu0 %v303
    %321 = vmatpush.bf16.msra.mxu0 %v302
    %322 = vmatpush.bf16.msra.mxu0 %v301
    %323 = vmatpush.bf16.msra.mxu0 %v300
    %324 = vmatmul.bf16.gmra.mxu0 %v267
    %v325 = vpop.f32.mrf.mxu0
    %v326 = vadd.f32 0.0, %v325
    %v327 = vpop.f32.mrf.mxu0
    %328 = vdwg.mxu0
    %329 = vst [vmem:[#allocation10] sm:$0xff] %v326
    // Predicated region
    $region42: #{tpu_custom_call.1} parent=1 // pred_check
      _
    $region43: #{tpu_custom_call.1} parent=1 // pred_check_branch
      %331 = sbr.rel (0) target = $region45
    $region44: #{tpu_custom_call.1} parent=1 // pred_region
      %333 = vsyncadd [#allocation4], 0
      %s335 = sshll.u32 [#allocation10], 4
      %s336 = int_to_ptr.vmem [resolvable:$true] %s335
      %s337 = sshll.u32 %s6, 4
      %s338 = int_to_ptr.hbm [resolvable:$true] %s337
      %340 = dma.vmem_to_hbm [thread:$0]  %s336, 128, %s338, [#allocation4]
    $region45: #{tpu_custom_call.1} parent=1 // pred_fallthru
      _
    // Predicated region
    $region46: #{tpu_custom_call.1} parent=1 // pred_check
      _
    $region47: #{tpu_custom_call.1} parent=1 // pred_check_branch
      %342 = sbr.rel (0) target = $region49
    $region48: #{tpu_custom_call.1} parent=1 // pred_region
      %344 = dma.done [#allocation4], 128
    $region49: #{tpu_custom_call.1} parent=1 // pred_fallthru
      _
    %345 = vsyncpa [#allocation3], 1
    %346 = vsyncpa [#allocation6], 1
    %347 = vsyncpa [#allocation9], 1
    %348 = vsyncpa [#allocation4], 1

</llo_original>
